<compile_context>
chip_gen: v7x
topology: tpu7x:2x2x1
jax: 0.10.0
libtpu: 0.0.40
codegen_flags: <defaults>
</compile_context>

<pallas_src>
import functools

import jax
import jax.numpy as jnp
from jax.experimental import pallas as pl
from jax.experimental.pallas import tpu as pltpu


def channel_attention_kernel(x_ref, w1t_ref, b1_ref, w2t_ref, b2_ref, out_ref,
                             sum_acc, max_acc, *, hw_total, needs_mask):
    hw_step = pl.program_id(1)
    n_hw_steps = pl.num_programs(1)
    n_blk = out_ref.shape[0]
    hw_blk = x_ref.shape[-1]

    # (n_blk, C, hw_blk) tile in its native dtype (no widened whole-tile copy:
    # max is exact in bf16, and the sum reduction widens per-vreg to f32).
    x = x_ref[...]
    if needs_mask:
        # HW was padded up to a multiple of hw_blk in the wrapper: padded
        # positions contribute 0 to the sum and -inf to the max.
        pos = hw_step * hw_blk + jax.lax.broadcasted_iota(jnp.int32, x.shape, 2)
        valid = pos < hw_total
        x_sum_in = jnp.where(valid, x, jnp.zeros_like(x))
        x_max_in = jnp.where(valid, x, jnp.full_like(x, -jnp.inf))
    else:
        x_sum_in = x
        x_max_in = x

    part_sum = jnp.sum(x_sum_in, axis=-1, dtype=jnp.float32)    # (n_blk, C)
    part_max = jnp.max(x_max_in, axis=-1).astype(jnp.float32)   # (n_blk, C)

    @pl.when(hw_step == 0)
    def _init():
        sum_acc[...] = jnp.zeros_like(sum_acc)
        max_acc[...] = jnp.full_like(max_acc, -jnp.inf)

    sum_acc[...] = sum_acc[...] + part_sum
    max_acc[...] = jnp.maximum(max_acc[...], part_max)

    @pl.when(hw_step == n_hw_steps - 1)
    def _finalize():
        avg = sum_acc[...] * (1.0 / hw_total)      # divide by TRUE HW
        mx = max_acc[...]

        # Stack avg & max: the shared 2-layer MLP becomes one pair of matmuls
        # with a (2*n_blk)-row LHS.  These few vmatmuls are fully hidden under
        # the x DMA stream (no need to pad C_red to 128 lanes).
        pooled = jnp.concatenate([avg, mx], axis=0)            # (2*n_blk, C)

        w1t = w1t_ref[...].astype(jnp.float32)    # (C, C_red)  fc1 weight^T
        b1 = b1_ref[...].astype(jnp.float32)      # (1, C_red)
        w2t = w2t_ref[...].astype(jnp.float32)    # (C_red, C)  fc2 weight^T
        b2 = b2_ref[...].astype(jnp.float32)      # (1, C)

        h = jnp.dot(pooled, w1t, preferred_element_type=jnp.float32) + b1
        h = jnp.maximum(h, 0.0)                                        # ReLU
        o = jnp.dot(h, w2t, preferred_element_type=jnp.float32) + b2   # (2n, C)

        out = jax.nn.sigmoid(o[:n_blk] + o[n_blk:])                    # (n_blk, C)
        out_ref[...] = out.astype(out_ref.dtype)


def _vmem_budgets():
    """Per-generation VMEM budgets: size tiles against the chip we run on."""
    vmem_cap = 64 * 1024 * 1024                   # conservative (v7x-sized) fallback
    try:
        info = pltpu.get_tpu_info()
        vmem_cap = int(getattr(info, "vmem_capacity_bytes", vmem_cap)) or vmem_cap
    except Exception:
        pass
    vmem_limit = int(vmem_cap * 0.80)             # scoped limit asked of Mosaic
    pipeline_budget = int(vmem_limit * 0.80)      # all (double-buffered) x tiles
    return vmem_limit, pipeline_budget


def _round_up(v, m):
    return -(-v // m) * m


def _choose_tiles(N, C, HW, itemsize, pipeline_budget):
    """Pick (n_pad, n_blk, hw_pad, hw_blk).

    Output blocks must be (multiple-of-8, C) or full-dims; x tiles are double
    buffered; on 2-TensorCore chips we want >= 2 N-blocks so the 'parallel'
    grid axis actually shards the HBM stream.
    """
    def x_bytes(nb, hb):
        return 2 * nb * C * hb * itemsize         # x2: double-buffered pipeline

    # ---------- Path A: whole-HW slabs fit in the budget ----------
    if x_bytes(min(N, 8), HW) <= pipeline_budget:
        if N <= 8 or (N < 16 and N % 8 != 0):
            if x_bytes(N, HW) <= pipeline_budget:
                # Tiny / awkward batch: one full-dims block (always a legal
                # block shape); padding just to split would add more HBM
                # traffic than a second core could recover.
                return N, N, HW, HW
        n_pad = _round_up(N, 8)
        cap = pipeline_budget // x_bytes(1, HW)            # max rows per tile
        cap = min(cap, max(8, n_pad // 2))                 # >=2 N-blocks (v7x megacore)
        n_blk = 8
        for cand in range(8, n_pad + 1, 8):                # largest aligned divisor <= cap
            if n_pad % cand == 0 and cand <= cap:
                n_blk = cand
        return n_pad, n_blk, HW, HW

    # ---------- Path B: one sample's (C, HW) slab is too big -> block HW ----------
    if N >= 8:
        n_pad, n_blk = _round_up(N, 8), 8                  # sublane-aligned out blocks
    else:
        n_pad, n_blk = N, N                                # full-dims N block, no padding
    cap_lanes = pipeline_budget // (2 * n_blk * C * itemsize)
    cap_lanes = max(128, (cap_lanes // 128) * 128)
    cap_lanes = min(cap_lanes, _round_up(HW, 128))
    # Prefer an exact multiple-of-128 divisor of HW (avoids an HBM pad copy of x).
    hw_blk = 0
    for cand in range(cap_lanes, 127, -128):
        if HW % cand == 0:
            hw_blk = cand
            break
    if hw_blk >= max(128, cap_lanes // 2):
        hw_pad = HW
    else:
        hw_blk = cap_lanes
        hw_pad = _round_up(HW, hw_blk)                     # masked tail inside kernel
    return n_pad, n_blk, hw_pad, hw_blk


def channel_attention(x, w1, b1, w2, b2):
    """x: (N, C, H, W); w1: (C_red, C); b1: (C_red,); w2: (C, C_red); b2: (C,)."""
    N, C, H, W = x.shape
    HW = H * W
    C_red = w1.shape[0]
    itemsize = jnp.dtype(x.dtype).itemsize

    vmem_limit, pipeline_budget = _vmem_budgets()
    n_pad, n_blk, hw_pad, hw_blk = _choose_tiles(N, C, HW, itemsize, pipeline_budget)

    x2 = x.reshape(N, C, HW)
    if n_pad != N or hw_pad != HW:
        # Rare path: only when N is not 8-aligned and must be split, or HW has
        # no suitable 128-multiple divisor and must be blocked.
        x2 = jnp.pad(x2, ((0, n_pad - N), (0, 0), (0, hw_pad - HW)))

    w1t = w1.T                      # (C, C_red) — pre-transpose outside kernel
    w2t = w2.T                      # (C_red, C)
    b1r = b1.reshape(1, C_red)      # lane-major bias rows (cheap VPU broadcast)
    b2r = b2.reshape(1, C)

    grid = (n_pad // n_blk, hw_pad // hw_blk)
    needs_mask = hw_pad != HW

    kernel = functools.partial(channel_attention_kernel,
                               hw_total=HW, needs_mask=needs_mask)

    cost = pl.CostEstimate(
        flops=2 * n_pad * C * hw_pad                # pooling (sum + max)
        + 8 * n_pad * C * C_red                     # two matmuls on 2*n rows
        + 4 * n_pad * C,                            # bias / relu / add
        transcendentals=n_pad * C,                  # sigmoid
        bytes_accessed=(n_pad * C * hw_pad + 2 * C * C_red + C_red + C
                        + n_pad * C) * itemsize,
    )

    out = pl.pallas_call(
        kernel,
        out_shape=jax.ShapeDtypeStruct((n_pad, C), x.dtype),
        grid_spec=pltpu.PrefetchScalarGridSpec(
            num_scalar_prefetch=0,
            grid=grid,
            in_specs=[
                pl.BlockSpec((n_blk, C, hw_blk), lambda n, h: (n, 0, h)),
                pl.BlockSpec((C, C_red), lambda n, h: (0, 0)),    # fc1 weight^T
                pl.BlockSpec((1, C_red), lambda n, h: (0, 0)),    # fc1 bias
                pl.BlockSpec((C_red, C), lambda n, h: (0, 0)),    # fc2 weight^T
                pl.BlockSpec((1, C), lambda n, h: (0, 0)),        # fc2 bias
            ],
            # Same output block across the HW axis -> resident accumulator;
            # lane-dense (n_blk, C) slab -> unmasked stores.
            out_specs=pl.BlockSpec((n_blk, C), lambda n, h: (n, 0)),
            scratch_shapes=[
                pltpu.VMEM((n_blk, C), jnp.float32),   # running sum
                pltpu.VMEM((n_blk, C), jnp.float32),   # running max
            ],
        ),
        compiler_params=pltpu.CompilerParams(
            dimension_semantics=("parallel", "arbitrary"),
            vmem_limit_bytes=vmem_limit,
        ),
        cost_estimate=cost,
    )(x2, w1t, b1r, w2t, b2r)

    return out[:N].reshape(N, C, 1, 1)


def channel_attention_ref(x, w1, b1, w2, b2):
    """Pure-JAX reference matching the PyTorch forward."""
    avg = jnp.mean(x, axis=(2, 3))   # (N, C)
    mx = jnp.max(x, axis=(2, 3))     # (N, C)

    def mlp(p):  # p: (N, C)
        h = jnp.maximum(p @ w1.T + b1, 0.0)
        return h @ w2.T + b2

    out = jax.nn.sigmoid(mlp(avg) + mlp(mx))
    return out[:, :, None, None]


if __name__ == "__main__":
    # Shapes consistent with the module: in_channels=64, reduction_ratio=16.
    N, C, H, W = 2, 64, 16, 16
    reduction_ratio = 16
    C_red = C // reduction_ratio

    key = jax.random.PRNGKey(0)
    kx, k1, k2, k3, k4 = jax.random.split(key, 5)

    x = jax.random.normal(kx, (N, C, H, W), dtype=jnp.float32)
    # Deterministic synthetic parameter init (Conv2d 1x1 == dense weights).
    w1 = jax.random.normal(k1, (C_red, C), dtype=jnp.float32) * 0.1
    b1 = jax.random.normal(k2, (C_red,), dtype=jnp.float32) * 0.1
    w2 = jax.random.normal(k3, (C, C_red), dtype=jnp.float32) * 0.1
    b2 = jax.random.normal(k4, (C,), dtype=jnp.float32) * 0.1

    out = channel_attention(x, w1, b1, w2, b2)
    out = jax.block_until_ready(out)

    ref = channel_attention_ref(x, w1, b1, w2, b2)
    assert out.shape == (N, C, 1, 1)
    assert jnp.allclose(out, ref, atol=1e-5, rtol=1e-5)

    print("KERNEL_OK")
</pallas_src>

<mosaic_0001>
module attributes {stable_mosaic.version = 11 : i64} {
  func.func @channel_attention_kernel(%arg0: i32, %arg1: i32, %arg2: memref<2x64x256xf32, #tpu.memory_space<vmem>>, %arg3: memref<64x4xf32, #tpu.memory_space<vmem>>, %arg4: memref<1x4xf32, #tpu.memory_space<vmem>>, %arg5: memref<4x64xf32, #tpu.memory_space<vmem>>, %arg6: memref<1x64xf32, #tpu.memory_space<vmem>>, %arg7: memref<2x64xf32, #tpu.memory_space<vmem>>, %arg8: memref<2x64xf32, #tpu.memory_space<vmem>>, %arg9: memref<2x64xf32, #tpu.memory_space<vmem>>) attributes {dimension_semantics = [#tpu.dimension_semantics<parallel>, #tpu.dimension_semantics<arbitrary>], iteration_bounds = array<i64: 1, 1>, scalar_prefetch = 0 : i64, scratch_operands = 2 : i64, tpu.core_type = #tpu.core_type<tc>, window_params = [{transform_indices = @transform_0, window_bounds = array<i64: 2, 64, 256>}, {pipeline_mode = #tpu.pipeline_mode<synchronous>, transform_indices = @transform_1, window_bounds = array<i64: 64, 4>}, {pipeline_mode = #tpu.pipeline_mode<synchronous>, transform_indices = @transform_2, window_bounds = array<i64: 1, 4>}, {pipeline_mode = #tpu.pipeline_mode<synchronous>, transform_indices = @transform_3, window_bounds = array<i64: 4, 64>}, {pipeline_mode = #tpu.pipeline_mode<synchronous>, transform_indices = @transform_4, window_bounds = array<i64: 1, 64>}, {transform_indices = @transform_5, window_bounds = array<i64: 2, 64>}]} {
    %c0 = arith.constant 0 : index
    %c0_0 = arith.constant 0 : index
    %c0_1 = arith.constant 0 : index
    %0 = vector.load %arg2[%c0, %c0_0, %c0_1] : memref<2x64x256xf32, #tpu.memory_space<vmem>>, vector<2x64x256xf32>
    %cst = arith.constant dense<0.000000e+00> : vector<2x64xf32>
    %1 = vector.multi_reduction <add>, %0, %cst [2] : vector<2x64x256xf32> to vector<2x64xf32>
    %cst_2 = arith.constant dense<0xFF800000> : vector<2x64xf32>
    %2 = vector.multi_reduction <maximumf>, %0, %cst_2 [2] : vector<2x64x256xf32> to vector<2x64xf32>
    %c0_i32 = arith.constant 0 : i32
    %3 = arith.cmpi eq, %arg1, %c0_i32 : i32
    %4 = arith.extui %3 : i1 to i32
    %c0_i32_3 = arith.constant 0 : i32
    %5 = arith.cmpi ne, %4, %c0_i32_3 : i32
    scf.if %5 {
      %cst_14 = arith.constant 0.000000e+00 : f32
      %15 = vector.broadcast %cst_14 : f32 to vector<2x64xf32>
      %c0_15 = arith.constant 0 : index
      %c0_16 = arith.constant 0 : index
      %16 = vector.load %arg8[%c0_15, %c0_16] : memref<2x64xf32, #tpu.memory_space<vmem>>, vector<2x64xf32>
      tpu.vector_store %arg8[%c0_15, %c0_16], %15 {strides = array<i32>} : memref<2x64xf32, #tpu.memory_space<vmem>>, vector<2x64xf32>,
      %cst_17 = arith.constant 0xFF800000 : f32
      %17 = vector.broadcast %cst_17 : f32 to vector<2x64xf32>
      %c0_18 = arith.constant 0 : index
      %c0_19 = arith.constant 0 : index
      %18 = vector.load %arg9[%c0_18, %c0_19] : memref<2x64xf32, #tpu.memory_space<vmem>>, vector<2x64xf32>
      tpu.vector_store %arg9[%c0_18, %c0_19], %17 {strides = array<i32>} : memref<2x64xf32, #tpu.memory_space<vmem>>, vector<2x64xf32>,
    } else {
    }
    %c0_4 = arith.constant 0 : index
    %c0_5 = arith.constant 0 : index
    %6 = vector.load %arg8[%c0_4, %c0_5] : memref<2x64xf32, #tpu.memory_space<vmem>>, vector<2x64xf32>
    %7 = arith.addf %6, %1 : vector<2x64xf32>
    %c0_6 = arith.constant 0 : index
    %c0_7 = arith.constant 0 : index
    %8 = vector.load %arg8[%c0_6, %c0_7] : memref<2x64xf32, #tpu.memory_space<vmem>>, vector<2x64xf32>
    tpu.vector_store %arg8[%c0_6, %c0_7], %7 {strides = array<i32>} : memref<2x64xf32, #tpu.memory_space<vmem>>, vector<2x64xf32>,
    %c0_8 = arith.constant 0 : index
    %c0_9 = arith.constant 0 : index
    %9 = vector.load %arg9[%c0_8, %c0_9] : memref<2x64xf32, #tpu.memory_space<vmem>>, vector<2x64xf32>
    %10 = arith.maximumf %9, %2 : vector<2x64xf32>
    %c0_10 = arith.constant 0 : index
    %c0_11 = arith.constant 0 : index
    %11 = vector.load %arg9[%c0_10, %c0_11] : memref<2x64xf32, #tpu.memory_space<vmem>>, vector<2x64xf32>
    tpu.vector_store %arg9[%c0_10, %c0_11], %10 {strides = array<i32>} : memref<2x64xf32, #tpu.memory_space<vmem>>, vector<2x64xf32>,
    %c0_i32_12 = arith.constant 0 : i32
    %12 = arith.cmpi eq, %arg1, %c0_i32_12 : i32
    %13 = arith.extui %12 : i1 to i32
    %c0_i32_13 = arith.constant 0 : i32
    %14 = arith.cmpi ne, %13, %c0_i32_13 : i32
    scf.if %14 {
      %c0_14 = arith.constant 0 : index
      %c0_15 = arith.constant 0 : index
      %15 = vector.load %arg8[%c0_14, %c0_15] : memref<2x64xf32, #tpu.memory_space<vmem>>, vector<2x64xf32>
      %cst_16 = arith.constant 3.906250e-03 : f32
      %16 = vector.broadcast %cst_16 : f32 to vector<2x64xf32>
      %17 = arith.mulf %15, %16 : vector<2x64xf32>
      %c0_17 = arith.constant 0 : index
      %c0_18 = arith.constant 0 : index
      %18 = vector.load %arg9[%c0_17, %c0_18] : memref<2x64xf32, #tpu.memory_space<vmem>>, vector<2x64xf32>
      %19 = tpu.concatenate %17, %18 in 0 : vector<2x64xf32>, vector<2x64xf32> -> vector<4x64xf32>
      %c0_19 = arith.constant 0 : index
      %c0_20 = arith.constant 0 : index
      %20 = vector.load %arg3[%c0_19, %c0_20] : memref<64x4xf32, #tpu.memory_space<vmem>>, vector<64x4xf32>
      %c0_21 = arith.constant 0 : index
      %c0_22 = arith.constant 0 : index
      %21 = vector.load %arg4[%c0_21, %c0_22] : memref<1x4xf32, #tpu.memory_space<vmem>>, vector<1x4xf32>
      %c0_23 = arith.constant 0 : index
      %c0_24 = arith.constant 0 : index
      %22 = vector.load %arg5[%c0_23, %c0_24] : memref<4x64xf32, #tpu.memory_space<vmem>>, vector<4x64xf32>
      %c0_25 = arith.constant 0 : index
      %c0_26 = arith.constant 0 : index
      %23 = vector.load %arg6[%c0_25, %c0_26] : memref<1x64xf32, #tpu.memory_space<vmem>>, vector<1x64xf32>
      %cst_27 = arith.constant dense<0.000000e+00> : vector<4x4xf32>
      %24 = tpu.matmul %19, %20, %cst_27 {dimension_numbers = #tpu.dot_dimension_numbers<[1], [0], [0], [1], [0, 0, 1, 1], [], []>} : vector<4x64xf32>, vector<64x4xf32>, vector<4x4xf32> -> vector<4x4xf32>
      %25 = vector.broadcast %21 : vector<1x4xf32> to vector<4x4xf32>
      %26 = arith.addf %24, %25 : vector<4x4xf32>
      %cst_28 = arith.constant 0.000000e+00 : f32
      %27 = vector.broadcast %cst_28 : f32 to vector<4x4xf32>
      %28 = arith.maximumf %26, %27 : vector<4x4xf32>
      %cst_29 = arith.constant dense<0.000000e+00> : vector<4x64xf32>
      %29 = tpu.matmul %28, %22, %cst_29 {dimension_numbers = #tpu.dot_dimension_numbers<[1], [0], [0], [1], [0, 0, 1, 1], [], []>} : vector<4x4xf32>, vector<4x64xf32>, vector<4x64xf32> -> vector<4x64xf32>
      %30 = vector.broadcast %23 : vector<1x64xf32> to vector<4x64xf32>
      %31 = arith.addf %29, %30 : vector<4x64xf32>
      %32 = vector.extract_strided_slice %31 {offsets = [0, 0], sizes = [2, 64], strides = [1, 1]} : vector<4x64xf32> to vector<2x64xf32>
      %33 = vector.extract_strided_slice %31 {offsets = [2, 0], sizes = [2, 64], strides = [1, 1]} : vector<4x64xf32> to vector<2x64xf32>
      %34 = arith.addf %32, %33 : vector<2x64xf32>
      %35 = arith.negf %34 : vector<2x64xf32>
      %36 = math.exp %35 : vector<2x64xf32>
      %cst_30 = arith.constant 1.000000e+00 : f32
      %37 = vector.broadcast %cst_30 : f32 to vector<2x64xf32>
      %38 = arith.addf %37, %36 : vector<2x64xf32>
      %39 = arith.divf %37, %38 : vector<2x64xf32>
      %c0_31 = arith.constant 0 : index
      %c0_32 = arith.constant 0 : index
      %40 = vector.load %arg7[%c0_31, %c0_32] : memref<2x64xf32, #tpu.memory_space<vmem>>, vector<2x64xf32>
      tpu.vector_store %arg7[%c0_31, %c0_32], %39 {strides = array<i32>} : memref<2x64xf32, #tpu.memory_space<vmem>>, vector<2x64xf32>,
    } else {
    }
    return
  }
  func.func @transform_0(%arg0: i32, %arg1: i32) -> (i32, i32, i32) {
    %c0_i32 = arith.constant 0 : i32
    %c0_i32_0 = arith.constant 0 : i32
    return %arg0, %c0_i32, %arg1 : i32, i32, i32
  }
  func.func @transform_1(%arg0: i32, %arg1: i32) -> (i32, i32) {
    %c0_i32 = arith.constant 0 : i32
    %c0_i32_0 = arith.constant 0 : i32
    %c0_i32_1 = arith.constant 0 : i32
    return %c0_i32, %c0_i32_0 : i32, i32
  }
  func.func @transform_2(%arg0: i32, %arg1: i32) -> (i32, i32) {
    %c0_i32 = arith.constant 0 : i32
    %c0_i32_0 = arith.constant 0 : i32
    %c0_i32_1 = arith.constant 0 : i32
    return %c0_i32, %c0_i32_0 : i32, i32
  }
  func.func @transform_3(%arg0: i32, %arg1: i32) -> (i32, i32) {
    %c0_i32 = arith.constant 0 : i32
    %c0_i32_0 = arith.constant 0 : i32
    %c0_i32_1 = arith.constant 0 : i32
    return %c0_i32, %c0_i32_0 : i32, i32
  }
  func.func @transform_4(%arg0: i32, %arg1: i32) -> (i32, i32) {
    %c0_i32 = arith.constant 0 : i32
    %c0_i32_0 = arith.constant 0 : i32
    %c0_i32_1 = arith.constant 0 : i32
    return %c0_i32, %c0_i32_0 : i32, i32
  }
  func.func @transform_5(%arg0: i32, %arg1: i32) -> (i32, i32) {
    %c0_i32 = arith.constant 0 : i32
    %c0_i32_0 = arith.constant 0 : i32
    return %arg0, %c0_i32 : i32, i32
  }
}

</mosaic_0001>

<llo_original>
// kernel: tpu_custom_call.1
$region0: #{tpu_custom_call.1}
  #allocation0 [shape = 'u32[]', space=smem, size = 0x4, offset = 0x4, fixed_abs, tag = 'smem constant byte address 0x4 - core index']
  #allocation1 [shape = 'u32[144,128]{1,0:T(1,128)}', space=vmem, size = 0x12000, scoped, tag = 'internal scratch']
  #allocation2 [shape = 'f32[2,64]{1,0:T(2,128)}', space=vmem, size = 0x400, scoped, tag = 'scratch operand']
  #allocation3 [shape = 'f32[2,64]{1,0:T(2,128)}', space=vmem, size = 0x400, scoped, tag = 'scratch operand']
  %s0 = inlined_call_operand.hbm [shape: f32[2,64,256], index: 0, kind: input, shape index: {}]
  %s1 = inlined_call_operand.vmem [shape: f32[64,4], index: 1, kind: input, shape index: {}]
  %s2 = inlined_call_operand.vmem [shape: f32[1,4], index: 2, kind: input, shape index: {}]
  %s3 = inlined_call_operand.vmem [shape: f32[4,64], index: 3, kind: input, shape index: {}]
  %s4 = inlined_call_operand.vmem [shape: f32[1,64], index: 4, kind: input, shape index: {}]
  %s5 = inlined_call_operand.hbm [shape: f32[2,64], index: 5, kind: output, shape index: {}]
  %s6 = sld [smem:[#allocation0]]
  $region42: #{tpu_custom_call.1} parent=0
    _
  %s8 = ssub.s32 1, %s6
  %s9 = scalar_select 0, %s8, %s6
  $region1: #{tpu_custom_call.1} parent=0
    #allocation4 [shape = 'u8[131072]{0}', space=vmem, size = 0x20000, scoped, tag = 'input window, operand 0, single buffered']
    #allocation5 [shape = 's32[1]{0}', space=sflag, size = 0x4, scoped, tag = 'scoped memory for tpu_custom_call.1']
    #allocation6 [shape = 's32[1]{0}', space=sflag, size = 0x4, scoped, tag = 'scoped memory for tpu_custom_call.1']
    #allocation7 [shape = 'u8[1024]{0}', space=vmem, size = 0x400, scoped, tag = 'output window, operand 0, single buffered']
    %10 = vsyncpa [#allocation5], 0
    %11 = vsyncpa [#allocation6], 0
    // Predicated region
    $region2: #{tpu_custom_call.1} parent=1 // pred_check
      _
    $region3: #{tpu_custom_call.1} parent=1 // pred_check_branch
      %13 = sbr.rel (0) target = $region5
    $region4: #{tpu_custom_call.1} parent=1 // pred_region
      %s15 = ssub.s32 4096, 4096
      %16 = vsyncadd [#allocation5], %s15
      %s17 = sshll.u32 [#allocation4], 4
      %s18 = int_to_ptr.vmem [resolvable:$true] %s17
      %23 = dma.hbm_to_vmem [thread:$0]  %s0, 4096, %s18, [#allocation5], 256, 256, 16
    $region5: #{tpu_custom_call.1} parent=1 // pred_fallthru
      _
    // Predicated region
    $region6: #{tpu_custom_call.1} parent=1 // pred_check
      _
    $region7: #{tpu_custom_call.1} parent=1 // pred_check_branch
      %25 = sbr.rel (0) target = $region9
    $region8: #{tpu_custom_call.1} parent=1 // pred_region
      _
    $region9: #{tpu_custom_call.1} parent=1 // pred_fallthru
      _
    // Predicated region
    $region10: #{tpu_custom_call.1} parent=1 // pred_check
      _
    $region11: #{tpu_custom_call.1} parent=1 // pred_check_branch
      %27 = sbr.rel (0) target = $region13
    $region12: #{tpu_custom_call.1} parent=1 // pred_region
      _
    $region13: #{tpu_custom_call.1} parent=1 // pred_fallthru
      _
    // Predicated region
    $region14: #{tpu_custom_call.1} parent=1 // pred_check
      _
    $region15: #{tpu_custom_call.1} parent=1 // pred_check_branch
      %29 = sbr.rel (0) target = $region17
    $region16: #{tpu_custom_call.1} parent=1 // pred_region
      _
    $region17: #{tpu_custom_call.1} parent=1 // pred_fallthru
      _
    // Predicated region
    $region18: #{tpu_custom_call.1} parent=1 // pred_check
      _
    $region19: #{tpu_custom_call.1} parent=1 // pred_check_branch
      %31 = sbr.rel (0) target = $region21
    $region20: #{tpu_custom_call.1} parent=1 // pred_region
      _
    $region21: #{tpu_custom_call.1} parent=1 // pred_fallthru
      _
    // Predicated region
    $region22: #{tpu_custom_call.1} parent=1 // pred_check
      _
    $region23: #{tpu_custom_call.1} parent=1 // pred_check_branch
      %33 = sbr.rel (0) target = $region25
    $region24: #{tpu_custom_call.1} parent=1 // pred_region
      %34 = dma.done [#allocation5], 4096
    $region25: #{tpu_custom_call.1} parent=1 // pred_fallthru
      _
    %v35 = vld [vmem:[#allocation4] sm:$0xff]
    %v36 = vld [vmem:[#allocation4 + $0x8] sm:$0xff]
    %v37 = vld [vmem:[#allocation4 + $0x10] sm:$0xff]
    %v38 = vld [vmem:[#allocation4 + $0x18] sm:$0xff]
    %v39 = vld [vmem:[#allocation4 + $0x20] sm:$0xff]
    %v40 = vld [vmem:[#allocation4 + $0x28] sm:$0xff]
    %v41 = vld [vmem:[#allocation4 + $0x30] sm:$0xff]
    %v42 = vld [vmem:[#allocation4 + $0x38] sm:$0xff]
    %v43 = vld [vmem:[#allocation4 + $0x40] sm:$0xff]
    %v44 = vld [vmem:[#allocation4 + $0x48] sm:$0xff]
    %v45 = vld [vmem:[#allocation4 + $0x50] sm:$0xff]
    %v46 = vld [vmem:[#allocation4 + $0x58] sm:$0xff]
    %v47 = vld [vmem:[#allocation4 + $0x60] sm:$0xff]
    %v48 = vld [vmem:[#allocation4 + $0x68] sm:$0xff]
    %v49 = vld [vmem:[#allocation4 + $0x70] sm:$0xff]
    %v50 = vld [vmem:[#allocation4 + $0x78] sm:$0xff]
    %v51 = vld [vmem:[#allocation4 + $0x80] sm:$0xff]
    %v52 = vld [vmem:[#allocation4 + $0x88] sm:$0xff]
    %v53 = vld [vmem:[#allocation4 + $0x90] sm:$0xff]
    %v54 = vld [vmem:[#allocation4 + $0x98] sm:$0xff]
    %v55 = vld [vmem:[#allocation4 + $0xa0] sm:$0xff]
    %v56 = vld [vmem:[#allocation4 + $0xa8] sm:$0xff]
    %v57 = vld [vmem:[#allocation4 + $0xb0] sm:$0xff]
    %v58 = vld [vmem:[#allocation4 + $0xb8] sm:$0xff]
    %v59 = vld [vmem:[#allocation4 + $0xc0] sm:$0xff]
    %v60 = vld [vmem:[#allocation4 + $0xc8] sm:$0xff]
    %v61 = vld [vmem:[#allocation4 + $0xd0] sm:$0xff]
    %v62 = vld [vmem:[#allocation4 + $0xd8] sm:$0xff]
    %v63 = vld [vmem:[#allocation4 + $0xe0] sm:$0xff]
    %v64 = vld [vmem:[#allocation4 + $0xe8] sm:$0xff]
    %v65 = vld [vmem:[#allocation4 + $0xf0] sm:$0xff]
    %v66 = vld [vmem:[#allocation4 + $0xf8] sm:$0xff]
    %v67 = vadd.f32 %v35, %v36
    %68 = vadd.xlane.f32.xlu0 %v67
    %v69 = vpop.xlane.xlu0 %68
    %v70 = vadd.f32 %v37, %v38
    %71 = vadd.xlane.f32.xlu0 %v70
    %v72 = vpop.xlane.xlu0 %71
    %v73 = vadd.f32 %v39, %v40
    %74 = vadd.xlane.f32.xlu0 %v73
    %v75 = vpop.xlane.xlu0 %74
    %v76 = vadd.f32 %v41, %v42
    %77 = vadd.xlane.f32.xlu0 %v76
    %v78 = vpop.xlane.xlu0 %77
    %v79 = vadd.f32 %v43, %v44
    %80 = vadd.xlane.f32.xlu0 %v79
    %v81 = vpop.xlane.xlu0 %80
    %v82 = vadd.f32 %v45, %v46
    %83 = vadd.xlane.f32.xlu0 %v82
    %v84 = vpop.xlane.xlu0 %83
    %v85 = vadd.f32 %v47, %v48
    %86 = vadd.xlane.f32.xlu0 %v85
    %v87 = vpop.xlane.xlu0 %86
    %v88 = vadd.f32 %v49, %v50
    %89 = vadd.xlane.f32.xlu0 %v88
    %v90 = vpop.xlane.xlu0 %89
    %v91 = vadd.f32 %v51, %v52
    %92 = vadd.xlane.f32.xlu0 %v91
    %v93 = vpop.xlane.xlu0 %92
    %v94 = vadd.f32 %v53, %v54
    %95 = vadd.xlane.f32.xlu0 %v94
    %v96 = vpop.xlane.xlu0 %95
    %v97 = vadd.f32 %v55, %v56
    %98 = vadd.xlane.f32.xlu0 %v97
    %v99 = vpop.xlane.xlu0 %98
    %v100 = vadd.f32 %v57, %v58
    %101 = vadd.xlane.f32.xlu0 %v100
    %v102 = vpop.xlane.xlu0 %101
    %v103 = vadd.f32 %v59, %v60
    %104 = vadd.xlane.f32.xlu0 %v103
    %v105 = vpop.xlane.xlu0 %104
    %v106 = vadd.f32 %v61, %v62
    %107 = vadd.xlane.f32.xlu0 %v106
    %v108 = vpop.xlane.xlu0 %107
    %v109 = vadd.f32 %v63, %v64
    %110 = vadd.xlane.f32.xlu0 %v109
    %v111 = vpop.xlane.xlu0 %110
    %v112 = vadd.f32 %v65, %v66
    %113 = vadd.xlane.f32.xlu0 %v112
    %v114 = vpop.xlane.xlu0 %113
    %v115 = vmax.f32 %v35, %v36
    %116 = vmax.xlane.f32.xlu0 %v115
    %v117 = vpop.xlane.xlu0 %116
    %v118 = vmax.f32 %v37, %v38
    %119 = vmax.xlane.f32.xlu0 %v118
    %v120 = vpop.xlane.xlu0 %119
    %v121 = vmax.f32 %v39, %v40
    %122 = vmax.xlane.f32.xlu0 %v121
    %v123 = vpop.xlane.xlu0 %122
    %v124 = vmax.f32 %v41, %v42
    %125 = vmax.xlane.f32.xlu0 %v124
    %v126 = vpop.xlane.xlu0 %125
    %v127 = vmax.f32 %v43, %v44
    %128 = vmax.xlane.f32.xlu0 %v127
    %v129 = vpop.xlane.xlu0 %128
    %v130 = vmax.f32 %v45, %v46
    %131 = vmax.xlane.f32.xlu0 %v130
    %v132 = vpop.xlane.xlu0 %131
    %v133 = vmax.f32 %v47, %v48
    %134 = vmax.xlane.f32.xlu0 %v133
    %v135 = vpop.xlane.xlu0 %134
    %v136 = vmax.f32 %v49, %v50
    %137 = vmax.xlane.f32.xlu0 %v136
    %v138 = vpop.xlane.xlu0 %137
    %v139 = vmax.f32 %v51, %v52
    %140 = vmax.xlane.f32.xlu0 %v139
    %v141 = vpop.xlane.xlu0 %140
    %v142 = vmax.f32 %v53, %v54
    %143 = vmax.xlane.f32.xlu0 %v142
    %v144 = vpop.xlane.xlu0 %143
    %v145 = vmax.f32 %v55, %v56
    %146 = vmax.xlane.f32.xlu0 %v145
    %v147 = vpop.xlane.xlu0 %146
    %v148 = vmax.f32 %v57, %v58
    %149 = vmax.xlane.f32.xlu0 %v148
    %v150 = vpop.xlane.xlu0 %149
    %v151 = vmax.f32 %v59, %v60
    %152 = vmax.xlane.f32.xlu0 %v151
    %v153 = vpop.xlane.xlu0 %152
    %v154 = vmax.f32 %v61, %v62
    %155 = vmax.xlane.f32.xlu0 %v154
    %v156 = vpop.xlane.xlu0 %155
    %v157 = vmax.f32 %v63, %v64
    %158 = vmax.xlane.f32.xlu0 %v157
    %v159 = vpop.xlane.xlu0 %158
    %v160 = vmax.f32 %v65, %v66
    %161 = vmax.xlane.f32.xlu0 %v160
    %v162 = vpop.xlane.xlu0 %161
    %p163 = scmp.eq.s32.totalorder 0, 0
    // Predicated region
    $region26: #{tpu_custom_call.1} parent=1 // pred_check
      %p164 = pneg %p163
    $region27: #{tpu_custom_call.1} parent=1 // pred_check_branch
      %166 = sbr.rel (%p164) target = $region29
    $region28: #{tpu_custom_call.1} parent=1 // pred_region
      %vm167 = vcmask 517120
      %168 = vst.msk [vmem:[#allocation2] sm:$0x3] %vm167, 0.0
      %169 = vst.msk [vmem:[#allocation3] sm:$0x3] %vm167, -inf
    $region29: #{tpu_custom_call.1} parent=1 // pred_fallthru
      _
    %v170 = vld [vmem:[#allocation2] sm:$0x3]
    %v187 = vlaneseq
    %v188 = vand.u32 %v187, 127
    %v189 = vlaneseq
    %v190 = vshrl.u32 %v189, 7
    %v191 = vsub.s32 %v188, %v190
    %v192 = vrot.slane %v69, %v191
    %v193 = vadd.s32 %v188, 4294967288
    %v194 = vlaneseq
    %v195 = vshrl.u32 %v194, 7
    %v196 = vsub.s32 %v193, %v195
    %v197 = vrot.slane %v72, %v196
    %vm198 = vcmask 130112
    %v199 = vsel %vm198, %v197, %v192
    %v200 = vadd.s32 %v188, 4294967280
    %v201 = vlaneseq
    %v202 = vshrl.u32 %v201, 7
    %v203 = vsub.s32 %v200, %v202
    %v204 = vrot.slane %v75, %v203
    %vm205 = vcmask 195712
    %v206 = vsel %vm205, %v204, %v199
    %v207 = vadd.s32 %v188, 4294967272
    %v208 = vlaneseq
    %v209 = vshrl.u32 %v208, 7
    %v210 = vsub.s32 %v207, %v209
    %v211 = vrot.slane %v78, %v210
    %vm212 = vcmask 261312
    %v213 = vsel %vm212, %v211, %v206
    %v214 = vadd.s32 %v188, 4294967264
    %v215 = vlaneseq
    %v216 = vshrl.u32 %v215, 7
    %v217 = vsub.s32 %v214, %v216
    %v218 = vrot.slane %v81, %v217
    %vm219 = vcmask 326912
    %v220 = vsel %vm219, %v218, %v213
    %v221 = vadd.s32 %v188, 4294967256
    %v222 = vlaneseq
    %v223 = vshrl.u32 %v222, 7
    %v224 = vsub.s32 %v221, %v223
    %v225 = vrot.slane %v84, %v224
    %vm226 = vcmask 392512
    %v227 = vsel %vm226, %v225, %v220
    %v228 = vadd.s32 %v188, 4294967248
    %v229 = vlaneseq
    %v230 = vshrl.u32 %v229, 7
    %v231 = vsub.s32 %v228, %v230
    %v232 = vrot.slane %v87, %v231
    %vm233 = vcmask 458112
    %v234 = vsel %vm233, %v232, %v227
    %v235 = vadd.s32 %v188, 4294967240
    %v236 = vlaneseq
    %v237 = vshrl.u32 %v236, 7
    %v238 = vsub.s32 %v235, %v237
    %v239 = vrot.slane %v90, %v238
    %vm240 = vcmask 523712
    %v241 = vsel %vm240, %v239, %v234
    %v242 = vlaneseq
    %v243 = vshrl.u32 %v242, 7
    %v244 = vsub.s32 %v188, %v243
    %v245 = vrot.slane %v93, %v244
    %v246 = vlaneseq
    %v247 = vshrl.u32 %v246, 7
    %v248 = vsub.s32 %v193, %v247
    %v249 = vrot.slane %v96, %v248
    %v250 = vsel %vm198, %v249, %v245
    %v251 = vlaneseq
    %v252 = vshrl.u32 %v251, 7
    %v253 = vsub.s32 %v200, %v252
    %v254 = vrot.slane %v99, %v253
    %v255 = vsel %vm205, %v254, %v250
    %v256 = vlaneseq
    %v257 = vshrl.u32 %v256, 7
    %v258 = vsub.s32 %v207, %v257
    %v259 = vrot.slane %v102, %v258
    %v260 = vsel %vm212, %v259, %v255
    %v261 = vlaneseq
    %v262 = vshrl.u32 %v261, 7
    %v263 = vsub.s32 %v214, %v262
    %v264 = vrot.slane %v105, %v263
    %v265 = vsel %vm219, %v264, %v260
    %v266 = vlaneseq
    %v267 = vshrl.u32 %v266, 7
    %v268 = vsub.s32 %v221, %v267
    %v269 = vrot.slane %v108, %v268
    %v270 = vsel %vm226, %v269, %v265
    %v271 = vlaneseq
    %v272 = vshrl.u32 %v271, 7
    %v273 = vsub.s32 %v228, %v272
    %v274 = vrot.slane %v111, %v273
    %v275 = vsel %vm233, %v274, %v270
    %v276 = vlaneseq
    %v277 = vshrl.u32 %v276, 7
    %v278 = vsub.s32 %v235, %v277
    %v279 = vrot.slane %v114, %v278
    %v280 = vsel %vm240, %v279, %v275
    %vm281 = vcmask 1041409
    %v282 = vsel %vm281, %v280, %v241
    %v284 = vadd.f32 %v170, %v282
    %vm285 = vcmask 517120
    %286 = vst.msk [vmem:[#allocation2] sm:$0x3] %vm285, %v284
    %v287 = vld [vmem:[#allocation3] sm:$0x3]
    %v304 = vlaneseq
    %v305 = vshrl.u32 %v304, 7
    %v306 = vsub.s32 %v188, %v305
    %v307 = vrot.slane %v117, %v306
    %v308 = vlaneseq
    %v309 = vshrl.u32 %v308, 7
    %v310 = vsub.s32 %v193, %v309
    %v311 = vrot.slane %v120, %v310
    %v312 = vsel %vm198, %v311, %v307
    %v313 = vlaneseq
    %v314 = vshrl.u32 %v313, 7
    %v315 = vsub.s32 %v200, %v314
    %v316 = vrot.slane %v123, %v315
    %v317 = vsel %vm205, %v316, %v312
    %v318 = vlaneseq
    %v319 = vshrl.u32 %v318, 7
    %v320 = vsub.s32 %v207, %v319
    %v321 = vrot.slane %v126, %v320
    %v322 = vsel %vm212, %v321, %v317
    %v323 = vlaneseq
    %v324 = vshrl.u32 %v323, 7
    %v325 = vsub.s32 %v214, %v324
    %v326 = vrot.slane %v129, %v325
    %v327 = vsel %vm219, %v326, %v322
    %v328 = vlaneseq
    %v329 = vshrl.u32 %v328, 7
    %v330 = vsub.s32 %v221, %v329
    %v331 = vrot.slane %v132, %v330
    %v332 = vsel %vm226, %v331, %v327
    %v333 = vlaneseq
    %v334 = vshrl.u32 %v333, 7
    %v335 = vsub.s32 %v228, %v334
    %v336 = vrot.slane %v135, %v335
    %v337 = vsel %vm233, %v336, %v332
    %v338 = vlaneseq
    %v339 = vshrl.u32 %v338, 7
    %v340 = vsub.s32 %v235, %v339
    %v341 = vrot.slane %v138, %v340
    %v342 = vsel %vm240, %v341, %v337
    %v343 = vlaneseq
    %v344 = vshrl.u32 %v343, 7
    %v345 = vsub.s32 %v188, %v344
    %v346 = vrot.slane %v141, %v345
    %v347 = vlaneseq
    %v348 = vshrl.u32 %v347, 7
    %v349 = vsub.s32 %v193, %v348
    %v350 = vrot.slane %v144, %v349
    %v351 = vsel %vm198, %v350, %v346
    %v352 = vlaneseq
    %v353 = vshrl.u32 %v352, 7
    %v354 = vsub.s32 %v200, %v353
    %v355 = vrot.slane %v147, %v354
    %v356 = vsel %vm205, %v355, %v351
    %v357 = vlaneseq
    %v358 = vshrl.u32 %v357, 7
    %v359 = vsub.s32 %v207, %v358
    %v360 = vrot.slane %v150, %v359
    %v361 = vsel %vm212, %v360, %v356
    %v362 = vlaneseq
    %v363 = vshrl.u32 %v362, 7
    %v364 = vsub.s32 %v214, %v363
    %v365 = vrot.slane %v153, %v364
    %v366 = vsel %vm219, %v365, %v361
    %v367 = vlaneseq
    %v368 = vshrl.u32 %v367, 7
    %v369 = vsub.s32 %v221, %v368
    %v370 = vrot.slane %v156, %v369
    %v371 = vsel %vm226, %v370, %v366
    %v372 = vlaneseq
    %v373 = vshrl.u32 %v372, 7
    %v374 = vsub.s32 %v228, %v373
    %v375 = vrot.slane %v159, %v374
    %v376 = vsel %vm233, %v375, %v371
    %v377 = vlaneseq
    %v378 = vshrl.u32 %v377, 7
    %v379 = vsub.s32 %v235, %v378
    %v380 = vrot.slane %v162, %v379
    %v381 = vsel %vm240, %v380, %v376
    %v382 = vsel %vm281, %v381, %v342
    %v384 = vmax.f32 %v287, %v382
    %385 = vst.msk [vmem:[#allocation3] sm:$0x3] %vm285, %v384
    // Predicated region
    $region30: #{tpu_custom_call.1} parent=1 // pred_check
      %p386 = pneg %p163
    $region31: #{tpu_custom_call.1} parent=1 // pred_check_branch
      %388 = sbr.rel (%p386) target = $region33
    $region32: #{tpu_custom_call.1} parent=1 // pred_region
      %v389 = vld [vmem:[#allocation2] sm:$0x3]
      %v390 = vmul.f32 %v389, 0.00390625
      %v391 = vld [vmem:[#allocation3] sm:$0x3]
      %v393 = vrot.slane %v391, 6
      %vm395 = vcmask 1041408
      %v396 = vsel %vm395, %v390, %v393
      %v397 = vld [vmem:[%s1] sm:$0xff]
      %v398 = vld [vmem:[%s1 + $0x8] sm:$0xff]
      %v399 = vld [vmem:[%s1 + $0x10] sm:$0xff]
      %v400 = vld [vmem:[%s1 + $0x18] sm:$0xff]
      %v401 = vld [vmem:[%s1 + $0x20] sm:$0xff]
      %v402 = vld [vmem:[%s1 + $0x28] sm:$0xff]
      %v403 = vld [vmem:[%s1 + $0x30] sm:$0xff]
      %v404 = vld [vmem:[%s1 + $0x38] sm:$0xff]
      %v405 = vld [vmem:[%s2] sm:$0x1]
      %v406 = vld [vmem:[%s3] sm:$0xf]
      %v407 = vld [vmem:[%s4] sm:$0x1]
      %v409 = vlaneseq
      %v410 = vshrl.u32 %v409, 7
      %v411 = vsub.s32 0, %v410
      %v412 = vrot.slane %v405, %v411
      %vm414 = vcmask 523264
      %v416 = vsel %vm414, %v396, 0
      %418 = vmatprep.subr.mxu0 0.0
      %419 = vmatpush1.msra.mxu0 %v397
      %420 = vmatprep.subr.mxu0 0.0
      %421 = vmatpush1.msra.mxu0 %v398
      %422 = vmatprep.subr.mxu0 0.0
      %423 = vmatpush1.msra.mxu0 %v399
      %424 = vmatprep.subr.mxu0 0.0
      %425 = vmatpush1.msra.mxu0 %v400
      %426 = vmatprep.subr.mxu0 0.0
      %427 = vmatpush1.msra.mxu0 %v401
      %428 = vmatprep.subr.mxu0 0.0
      %429 = vmatpush1.msra.mxu0 %v402
      %430 = vmatprep.subr.mxu0 0.0
      %431 = vmatpush1.msra.mxu0 %v403
      %432 = vmatprep.subr.mxu0 0.0
      %433 = vmatpush1.msra.mxu0 %v404
      %434 = vmatprep.subr.mxu0 0.0
      %435 = vmatpush1.msra.mxu0 0.0
      %436 = vmatprep.subr.mxu0 0.0
      %437 = vmatpush1.msra.mxu0 0.0
      %438 = vmatprep.subr.mxu0 0.0
      %439 = vmatpush1.msra.mxu0 0.0
      %440 = vmatprep.subr.mxu0 0.0
      %441 = vmatpush1.msra.mxu0 0.0
      %442 = vmatprep.subr.mxu0 0.0
      %443 = vmatpush1.msra.mxu0 0.0
      %444 = vmatprep.subr.mxu0 0.0
      %445 = vmatpush1.msra.mxu0 0.0
      %446 = vmatprep.subr.mxu0 0.0
      %447 = vmatpush1.msra.mxu0 0.0
      %448 = vmatprep.subr.mxu0 0.0
      %449 = vmatpush1.msra.mxu0 0.0
      %450 = vmatprep.subr.mxu0 0.0
      %451 = vmatpush1.msra.mxu0 0.0
      %452 = vmatprep.subr.mxu0 0.0
      %453 = vmatpush1.msra.mxu0 0.0
      %454 = vmatprep.subr.mxu0 0.0
      %455 = vmatpush1.msra.mxu0 0.0
      %456 = vmatprep.subr.mxu0 0.0
      %457 = vmatpush1.msra.mxu0 0.0
      %458 = vmatprep.subr.mxu0 0.0
      %459 = vmatpush1.msra.mxu0 0.0
      %460 = vmatprep.subr.mxu0 0.0
      %461 = vmatpush1.msra.mxu0 0.0
      %462 = vmatprep.subr.mxu0 0.0
      %463 = vmatpush1.msra.mxu0 0.0
      %464 = vmatprep.subr.mxu0 0.0
      %465 = vmatpush1.msra.mxu0 0.0
      %466 = vmatprep.subr.mxu0 0.0
      %467 = vmatpush1.msra.mxu0 0.0
      %468 = vmatprep.subr.mxu0 0.0
      %469 = vmatpush1.msra.mxu0 0.0
      %470 = vmatprep.subr.mxu0 0.0
      %471 = vmatpush1.msra.mxu0 0.0
      %472 = vmatprep.subr.mxu0 0.0
      %473 = vmatpush1.msra.mxu0 0.0
      %474 = vmatprep.subr.mxu0 0.0
      %475 = vmatpush1.msra.mxu0 0.0
      %476 = vmatprep.subr.mxu0 0.0
      %477 = vmatpush1.msra.mxu0 0.0
      %478 = vmatprep.subr.mxu0 0.0
      %479 = vmatpush1.msra.mxu0 0.0
      %480 = vmatprep.subr.mxu0 0.0
      %481 = vmatpush1.msra.mxu0 0.0
      %482 = vmatprep.mubr.f32.mxu0 0.0
      %483 = vmatmul.mubr.f32.gmra.mrb[0].mxu0 %v416
      %v484 = vpop.f32.mrb[0].mxu0
      %v485 = vadd.f32 %v412, %v484
      %v486 = vpop.f32.mrb[0].mxu0
      %487 = vdwg.mxu0
      %v488 = vmax.f32 %v485, 0.0
      %v490 = vlaneseq
      %v491 = vshrl.u32 %v490, 7
      %v492 = vsub.s32 0, %v491
      %v493 = vrot.slane %v407, %v492
      %vm495 = vcmask 31744
      %v497 = vsel %vm495, %v488, 0
      %vm499 = vcmask 1043456
      %v501 = vsel %vm499, %v406, 0
      %503 = vmatprep.subr.mxu0 0.0
      %504 = vmatpush1.msra.mxu0 %v501
      %505 = vmatprep.subr.mxu0 0.0
      %506 = vmatpush1.msra.mxu0 0.0
      %507 = vmatprep.subr.mxu0 0.0
      %508 = vmatpush1.msra.mxu0 0.0
      %509 = vmatprep.subr.mxu0 0.0
      %510 = vmatpush1.msra.mxu0 0.0
      %511 = vmatprep.subr.mxu0 0.0
      %512 = vmatpush1.msra.mxu0 0.0
      %513 = vmatprep.subr.mxu0 0.0
      %514 = vmatpush1.msra.mxu0 0.0
      %515 = vmatprep.subr.mxu0 0.0
      %516 = vmatpush1.msra.mxu0 0.0
      %517 = vmatprep.subr.mxu0 0.0
      %518 = vmatpush1.msra.mxu0 0.0
      %519 = vmatprep.subr.mxu0 0.0
      %520 = vmatpush1.msra.mxu0 0.0
      %521 = vmatprep.subr.mxu0 0.0
      %522 = vmatpush1.msra.mxu0 0.0
      %523 = vmatprep.subr.mxu0 0.0
      %524 = vmatpush1.msra.mxu0 0.0
      %525 = vmatprep.subr.mxu0 0.0
      %526 = vmatpush1.msra.mxu0 0.0
      %527 = vmatprep.subr.mxu0 0.0
      %528 = vmatpush1.msra.mxu0 0.0
      %529 = vmatprep.subr.mxu0 0.0
      %530 = vmatpush1.msra.mxu0 0.0
      %531 = vmatprep.subr.mxu0 0.0
      %532 = vmatpush1.msra.mxu0 0.0
      %533 = vmatprep.subr.mxu0 0.0
      %534 = vmatpush1.msra.mxu0 0.0
      %535 = vmatprep.subr.mxu0 0.0
      %536 = vmatpush1.msra.mxu0 0.0
      %537 = vmatprep.subr.mxu0 0.0
      %538 = vmatpush1.msra.mxu0 0.0
      %539 = vmatprep.subr.mxu0 0.0
      %540 = vmatpush1.msra.mxu0 0.0
      %541 = vmatprep.subr.mxu0 0.0
      %542 = vmatpush1.msra.mxu0 0.0
      %543 = vmatprep.subr.mxu0 0.0
      %544 = vmatpush1.msra.mxu0 0.0
      %545 = vmatprep.subr.mxu0 0.0
      %546 = vmatpush1.msra.mxu0 0.0
      %547 = vmatprep.subr.mxu0 0.0
      %548 = vmatpush1.msra.mxu0 0.0
      %549 = vmatprep.subr.mxu0 0.0
      %550 = vmatpush1.msra.mxu0 0.0
      %551 = vmatprep.subr.mxu0 0.0
      %552 = vmatpush1.msra.mxu0 0.0
      %553 = vmatprep.subr.mxu0 0.0
      %554 = vmatpush1.msra.mxu0 0.0
      %555 = vmatprep.subr.mxu0 0.0
      %556 = vmatpush1.msra.mxu0 0.0
      %557 = vmatprep.subr.mxu0 0.0
      %558 = vmatpush1.msra.mxu0 0.0
      %559 = vmatprep.subr.mxu0 0.0
      %560 = vmatpush1.msra.mxu0 0.0
      %561 = vmatprep.subr.mxu0 0.0
      %562 = vmatpush1.msra.mxu0 0.0
      %563 = vmatprep.subr.mxu0 0.0
      %564 = vmatpush1.msra.mxu0 0.0
      %565 = vmatprep.subr.mxu0 0.0
      %566 = vmatpush1.msra.mxu0 0.0
      %567 = vmatprep.mubr.f32.mxu0 0.0
      %568 = vmatmul.mubr.f32.gmra.mrb[0].mxu0 %v497
      %v569 = vpop.f32.mrb[0].mxu0
      %v570 = vadd.f32 %v493, %v569
      %v571 = vpop.f32.mrb[0].mxu0
      %572 = vdwg.mxu0
      %v574 = vrot.slane %v570, 2
      %v576 = vadd.f32 %v570, %v574
      %v577 = vxor.u32 %v576, 2147483648
      %v578 = vmul.f32 %v577, 1.442695
      %v579 = vpow.pop %v578
      %v580 = vadd.f32 %v579, 1.0
      %v581 = vrcp.pop %v580
      %v582 = vmul.f32 1.0, %v581
      %583 = vst.msk [vmem:[#allocation7] sm:$0x3] %vm285, %v582
    $region33: #{tpu_custom_call.1} parent=1 // pred_fallthru
      _
    // Predicated region
    $region34: #{tpu_custom_call.1} parent=1 // pred_check
      _
    $region35: #{tpu_custom_call.1} parent=1 // pred_check_branch
      %585 = sbr.rel (0) target = $region37
    $region36: #{tpu_custom_call.1} parent=1 // pred_region
      %s587 = ssub.s32 32, 32
      %588 = vsyncadd [#allocation6], %s587
      %s590 = sshll.u32 [#allocation7], 4
      %s591 = int_to_ptr.vmem [resolvable:$true] %s590
      %593 = dma.vmem_to_hbm [thread:$0]  %s591, 32, %s5, [#allocation6]
    $region37: #{tpu_custom_call.1} parent=1 // pred_fallthru
      _
    // Predicated region
    $region38: #{tpu_custom_call.1} parent=1 // pred_check
      _
    $region39: #{tpu_custom_call.1} parent=1 // pred_check_branch
      %595 = sbr.rel (0) target = $region41
    $region40: #{tpu_custom_call.1} parent=1 // pred_region
      %596 = dma.done [#allocation6], 32
    $region41: #{tpu_custom_call.1} parent=1 // pred_fallthru
      _
    %597 = vsyncpa [#allocation5], 1
    %598 = vsyncpa [#allocation6], 1

</llo_original>
